<compile_context>
chip_gen: v6e
topology: v6e:2x2x1
jax: 0.10.0
libtpu: 0.0.40
codegen_flags: <defaults>
</compile_context>

<pallas_src>
import functools
import math

import jax
import jax.numpy as jnp
from jax.experimental import pallas as pl
from jax.experimental.pallas import tpu as pltpu


# ----------------------------- kernels ------------------------------------- #

def _pe_add_kernel(x_ref, pe_ref, o_ref):
    # x_ref block: (TB, TC); pe_ref block: (1, TC) -> broadcasts over the rows.
    o_ref[...] = (x_ref[...] + pe_ref[...]).astype(o_ref.dtype)


def _pe_add_dropout_kernel(x_ref, pe_ref, bits_ref, o_ref, *, threshold, scale):
    # Integer-threshold dropout: `bits` are uniform int32, keep iff bits >= T,
    # with T chosen so P(keep) == 1 - p (exact to 2^-32).  All math stays in
    # x's dtype (no f32 promotion of the tile).
    # TODO(synk): torch's dropout RNG stream cannot be bit-reproduced; the mask
    # comes from jax.random bits generated in the wrapper (portable to both TPU
    # and interpret mode, unlike the in-kernel pltpu hardware PRNG).
    y = x_ref[...] + pe_ref[...]
    keep = bits_ref[...] >= jnp.int32(threshold)
    scale_c = jnp.asarray(scale, dtype=y.dtype)
    o_ref[...] = jnp.where(keep, y * scale_c, jnp.zeros_like(y)).astype(o_ref.dtype)


# ----------------------------- setup (plain JAX) ---------------------------- #

def make_positional_encoding_table(max_length, d_model, dtype=jnp.float32):
    """Deterministic sinusoidal table, identical to the PyTorch __init__."""
    k = jnp.arange(max_length, dtype=jnp.float32)[:, None]                 # (L, 1)
    div_term = jnp.exp(
        jnp.arange(0, d_model, 2, dtype=jnp.float32)
        * (-math.log(10000.0) / d_model)
    )                                                                      # (D/2,)
    pe = jnp.zeros((max_length, d_model), dtype=jnp.float32)
    pe = pe.at[:, 0::2].set(jnp.sin(k * div_term))
    pe = pe.at[:, 1::2].set(jnp.cos(k * div_term))
    return pe.astype(dtype)


# ----------------------------- wrapper -------------------------------------- #

_MAX_TC = 32 * 1024          # column tile cap (multiple of 128); ~1 MiB f32 @ TB=8
_VMEM_LIMIT = 32 * 1024 * 1024


def positional_encoding_forward(x, pe, *, dropout_p, key=None, training=True):
    """x: (B, S, D), pe: (max_length, D).  Returns dropout(x + pe[:S])."""
    B, S, D = x.shape
    C = S * D
    p = float(dropout_p)

    # Lane-dense 2D layout: last dim S*D maps densely onto the 128-lane vregs
    # even when D < 128 (e.g. D = 32), so stores are full-width vst.
    x2 = x.reshape(B, C)
    pe2 = pe[:S].reshape(1, C).astype(x.dtype)   # pre-cast once in the wrapper

    # Tile sizes: bounded blocks that satisfy the (8, 128) constraint and keep
    # double-buffered VMEM use well under the v7x 64 MiB budget.
    TB = B if B <= 8 else 8
    if C % 128 == 0:
        TC = min(C, _MAX_TC)
    else:
        TC = C                                    # full last dim (always legal)
    grid = (pl.cdiv(B, TB), pl.cdiv(C, TC))

    x_spec = pl.BlockSpec((TB, TC), lambda i, j: (i, j))
    pe_spec = pl.BlockSpec((1, TC), lambda i, j: (0, j))
    out_spec = pl.BlockSpec((TB, TC), lambda i, j: (i, j))
    out_shape = jax.ShapeDtypeStruct((B, C), x.dtype)
    cparams = pltpu.CompilerParams(
        # No in-kernel PRNG state -> every grid point is independent; let the
        # grid shard across both TCs on v7x (neutral on v5e/v6e).
        dimension_semantics=("parallel", "parallel"),
        vmem_limit_bytes=_VMEM_LIMIT,
    )

    use_dropout = training and p > 0.0
    if use_dropout and p >= 1.0:
        return jnp.zeros_like(x)                  # nn.Dropout(p=1) zeroes everything

    if not use_dropout:
        y2 = pl.pallas_call(
            _pe_add_kernel,
            out_shape=out_shape,
            grid=grid,
            in_specs=[x_spec, pe_spec],
            out_specs=out_spec,
            compiler_params=cparams,
        )(x2, pe2)
    else:
        if key is None:
            key = jax.random.PRNGKey(0)
        bits_u = jax.random.bits(key, (B, C), jnp.uint32)
        bits = jax.lax.bitcast_convert_type(bits_u, jnp.int32)  # uniform over int32
        # keep iff bits >= T  with  T = round(p * 2^32) - 2^31  =>  P(keep) = 1 - p
        threshold = int(round(p * (2 ** 32))) - 2 ** 31
        threshold = max(-(2 ** 31), min(threshold, 2 ** 31 - 1))
        scale = 1.0 / (1.0 - p)
        kernel = functools.partial(
            _pe_add_dropout_kernel, threshold=threshold, scale=scale
        )
        bits_spec = pl.BlockSpec((TB, TC), lambda i, j: (i, j))
        y2 = pl.pallas_call(
            kernel,
            out_shape=out_shape,
            grid=grid,
            in_specs=[x_spec, pe_spec, bits_spec],
            out_specs=out_spec,
            compiler_params=cparams,
        )(x2, pe2, bits)

    return y2.reshape(B, S, D)


# ----------------------------- self-test ------------------------------------ #

if __name__ == "__main__":
    # Module config (deterministic, in-script)
    d_model = 32
    max_length = 16
    dropout_p = 0.1

    key = jax.random.PRNGKey(0)
    kx, kdrop = jax.random.split(key)
    x = jax.random.normal(kx, (2, 8, d_model), dtype=jnp.float32)

    pe = make_positional_encoding_table(max_length, d_model)

    # Eval mode (dropout disabled): exact semantics vs. the reference add.
    y_eval = positional_encoding_forward(x, pe, dropout_p=dropout_p, training=False)
    y_eval = jax.block_until_ready(y_eval)
    ref = x + pe[None, : x.shape[1], :]
    assert y_eval.shape == x.shape and y_eval.dtype == x.dtype
    assert jnp.allclose(y_eval, ref, atol=1e-6, rtol=1e-6)

    # Training mode (dropout active, deterministic key).
    y_train = positional_encoding_forward(
        x, pe, dropout_p=dropout_p, key=kdrop, training=True
    )
    y_train = jax.block_until_ready(y_train)
    assert y_train.shape == x.shape and y_train.dtype == x.dtype
    # Every element is either dropped (exactly 0) or a survivor scaled by 1/(1-p).
    ref_scaled = ref / (1.0 - dropout_p)
    ok = jnp.isclose(y_train, 0.0, atol=1e-6) | jnp.isclose(
        y_train, ref_scaled, atol=1e-5, rtol=1e-5
    )
    assert bool(jnp.all(ok))

    print("KERNEL_OK")
</pallas_src>

<mosaic_0001>
module attributes {stable_mosaic.version = 11 : i64} {
  func.func @_pe_add_kernel(%arg0: i32, %arg1: i32, %arg2: memref<2x256xf32, #tpu.memory_space<vmem>>, %arg3: memref<1x256xf32, #tpu.memory_space<vmem>>, %arg4: memref<2x256xf32, #tpu.memory_space<vmem>>) attributes {dimension_semantics = [#tpu.dimension_semantics<parallel>, #tpu.dimension_semantics<parallel>], iteration_bounds = array<i64: 1, 1>, scalar_prefetch = 0 : i64, scratch_operands = 0 : i64, tpu.core_type = #tpu.core_type<tc>, window_params = [{transform_indices = @transform_0, window_bounds = array<i64: 2, 256>}, {transform_indices = @transform_1, window_bounds = array<i64: 1, 256>}, {transform_indices = @transform_2, window_bounds = array<i64: 2, 256>}]} {
    %c0 = arith.constant 0 : index
    %c0_0 = arith.constant 0 : index
    %0 = vector.load %arg2[%c0, %c0_0] : memref<2x256xf32, #tpu.memory_space<vmem>>, vector<2x256xf32>
    %c0_1 = arith.constant 0 : index
    %c0_2 = arith.constant 0 : index
    %1 = vector.load %arg3[%c0_1, %c0_2] : memref<1x256xf32, #tpu.memory_space<vmem>>, vector<1x256xf32>
    %2 = vector.broadcast %1 : vector<1x256xf32> to vector<2x256xf32>
    %3 = arith.addf %0, %2 : vector<2x256xf32>
    %c0_3 = arith.constant 0 : index
    %c0_4 = arith.constant 0 : index
    %4 = vector.load %arg4[%c0_3, %c0_4] : memref<2x256xf32, #tpu.memory_space<vmem>>, vector<2x256xf32>
    tpu.vector_store %arg4[%c0_3, %c0_4], %3 {strides = array<i32>} : memref<2x256xf32, #tpu.memory_space<vmem>>, vector<2x256xf32>,
    return
  }
  func.func @transform_0(%arg0: i32, %arg1: i32) -> (i32, i32) {
    %c0_i32 = arith.constant 0 : i32
    return %arg0, %arg1 : i32, i32
  }
  func.func @transform_1(%arg0: i32, %arg1: i32) -> (i32, i32) {
    %c0_i32 = arith.constant 0 : i32
    %c0_i32_0 = arith.constant 0 : i32
    return %c0_i32, %arg1 : i32, i32
  }
  func.func @transform_2(%arg0: i32, %arg1: i32) -> (i32, i32) {
    %c0_i32 = arith.constant 0 : i32
    return %arg0, %arg1 : i32, i32
  }
}

</mosaic_0001>

<llo_original>
// kernel: tpu_custom_call.1
$region0: #{tpu_custom_call.1}
  #allocation0 [shape = 'u32[]', space=smem, size = 0x4, offset = 0x4, fixed_abs, tag = 'smem constant byte address 0x4 - core index']
  #allocation1 [shape = 'u32[144,128]{1,0:T(1,128)}', space=vmem, size = 0x12000, scoped, tag = 'internal scratch']
  %s0 = inlined_call_operand.hbm [shape: f32[2,256], index: 0, kind: input, shape index: {}]
  %s1 = inlined_call_operand.hbm [shape: f32[1,256], index: 1, kind: input, shape index: {}]
  %s2 = inlined_call_operand.hbm [shape: f32[2,256], index: 2, kind: output, shape index: {}]
  %s3 = sld [smem:[#allocation0]]
  $region26: #{tpu_custom_call.1} parent=0
    _
  %s5 = ssub.s32 1, %s3
  %s6 = scalar_select 0, %s5, %s3
  $region1: #{tpu_custom_call.1} parent=0
    #allocation2 [shape = 'u8[2048]{0}', space=vmem, size = 0x800, scoped, tag = 'input window, operand 0, single buffered']
    #allocation3 [shape = 's32[1]{0}', space=sflag, size = 0x4, scoped, tag = 'scoped memory for tpu_custom_call.1']
    #allocation4 [shape = 's32[1]{0}', space=sflag, size = 0x4, scoped, tag = 'scoped memory for tpu_custom_call.1']
    #allocation5 [shape = 'u8[1024]{0}', space=vmem, size = 0x400, scoped, tag = 'input window, operand 1, single buffered']
    #allocation6 [shape = 's32[1]{0}', space=sflag, size = 0x4, scoped, tag = 'scoped memory for tpu_custom_call.1']
    #allocation7 [shape = 'u8[2048]{0}', space=vmem, size = 0x800, scoped, tag = 'output window, operand 0, single buffered']
    %7 = vsyncpa [#allocation3], 0
    %8 = vsyncpa [#allocation6], 0
    %9 = vsyncpa [#allocation4], 0
    // Predicated region
    $region2: #{tpu_custom_call.1} parent=1 // pred_check
      _
    $region3: #{tpu_custom_call.1} parent=1 // pred_check_branch
      %11 = sbr.rel (0) target = $region5
    $region4: #{tpu_custom_call.1} parent=1 // pred_region
      %s13 = ssub.s32 64, 64
      %14 = vsyncadd [#allocation3], %s13
      %s16 = sshll.u32 [#allocation2], 4
      %s17 = int_to_ptr.vmem [resolvable:$true] %s16
      %19 = dma.hbm_to_vmem [thread:$0]  %s0, 64, %s17, [#allocation3]
    $region5: #{tpu_custom_call.1} parent=1 // pred_fallthru
      _
    // Predicated region
    $region6: #{tpu_custom_call.1} parent=1 // pred_check
      _
    $region7: #{tpu_custom_call.1} parent=1 // pred_check_branch
      %21 = sbr.rel (0) target = $region9
    $region8: #{tpu_custom_call.1} parent=1 // pred_region
      %s23 = ssub.s32 32, 32
      %24 = vsyncadd [#allocation6], %s23
      %s26 = sshll.u32 [#allocation5], 4
      %s27 = int_to_ptr.vmem [resolvable:$true] %s26
      %29 = dma.hbm_to_vmem [thread:$0]  %s1, 32, %s27, [#allocation6]
    $region9: #{tpu_custom_call.1} parent=1 // pred_fallthru
      _
    // Predicated region
    $region10: #{tpu_custom_call.1} parent=1 // pred_check
      _
    $region11: #{tpu_custom_call.1} parent=1 // pred_check_branch
      %31 = sbr.rel (0) target = $region13
    $region12: #{tpu_custom_call.1} parent=1 // pred_region
      %32 = dma.done [#allocation3], 64
    $region13: #{tpu_custom_call.1} parent=1 // pred_fallthru
      _
    // Predicated region
    $region14: #{tpu_custom_call.1} parent=1 // pred_check
      _
    $region15: #{tpu_custom_call.1} parent=1 // pred_check_branch
      %34 = sbr.rel (0) target = $region17
    $region16: #{tpu_custom_call.1} parent=1 // pred_region
      %35 = dma.done [#allocation6], 32
    $region17: #{tpu_custom_call.1} parent=1 // pred_fallthru
      _
    %v36 = vld [vmem:[#allocation2] sm:$0xf]
    %v37 = vld [vmem:[#allocation5] sm:$0x3]
    %v39 = vlaneseq
    %v40 = vshrl.u32 %v39, 7
    %v41 = vsub.s32 0, %v40
    %v42 = vrot.slane %v37, %v41
    %v43 = vlaneseq
    %v44 = vshrl.u32 %v43, 7
    %v45 = vsub.s32 1, %v44
    %v46 = vrot.slane %v37, %v45
    %v47 = vcombine.low %v42, %v46
    %v49 = vunpack.c.l.s4 1983009808
    %v50 = vunpack.c.0.s8 %v49
    %v51 = vlaneseq
    %v52 = vshrl.u32 %v51, 7
    %v53 = vsub.s32 %v50, %v52
    %v54 = vrot.slane %v47, %v53
    %v56 = vadd.f32 %v36, %v54
    %57 = vst [vmem:[#allocation7] sm:$0xf] %v56
    // Predicated region
    $region18: #{tpu_custom_call.1} parent=1 // pred_check
      _
    $region19: #{tpu_custom_call.1} parent=1 // pred_check_branch
      %59 = sbr.rel (0) target = $region21
    $region20: #{tpu_custom_call.1} parent=1 // pred_region
      %s61 = ssub.s32 64, 64
      %62 = vsyncadd [#allocation4], %s61
      %s64 = sshll.u32 [#allocation7], 4
      %s65 = int_to_ptr.vmem [resolvable:$true] %s64
      %67 = dma.vmem_to_hbm [thread:$0]  %s65, 64, %s2, [#allocation4]
    $region21: #{tpu_custom_call.1} parent=1 // pred_fallthru
      _
    // Predicated region
    $region22: #{tpu_custom_call.1} parent=1 // pred_check
      _
    $region23: #{tpu_custom_call.1} parent=1 // pred_check_branch
      %69 = sbr.rel (0) target = $region25
    $region24: #{tpu_custom_call.1} parent=1 // pred_region
      %70 = dma.done [#allocation4], 64
    $region25: #{tpu_custom_call.1} parent=1 // pred_fallthru
      _
    %71 = vsyncpa [#allocation3], 1
    %72 = vsyncpa [#allocation6], 1
    %73 = vsyncpa [#allocation4], 1

</llo_original>
